<compile_context>
chip_gen: v7x
topology: tpu7x:2x2x1
jax: 0.10.0
libtpu: 0.0.40
codegen_flags: <defaults>
</compile_context>

<pallas_src>
import jax
import jax.numpy as jnp
from jax.experimental import pallas as pl
from jax.experimental.pallas import tpu as pltpu


def highway_kernel(xb_ref, w_ref, b_ref, xres_ref, o_ref):
    tn = o_ref.shape[-1]
    # Fused proj+gate GEMM: bf16 operands on the MXU, f32 accumulation.
    y = jnp.dot(xb_ref[...], w_ref[...], preferred_element_type=jnp.float32)  # (tm, 2*tn)
    y = y + b_ref[...]                                                         # f32 bias broadcast

    proj = jnp.maximum(y[:, :tn], 0.0)        # relu(x @ Wp^T + bp)
    gate = jax.nn.sigmoid(y[:, tn:])          # sigmoid(x @ Wg^T + bg)

    x_res = xres_ref[...]                     # full-precision f32 skip connection
    # Highway mix rewritten as x + gate*(proj - x): one fewer VPU multiply.
    # Dropout = identity (eval mode).
    o_ref[...] = (x_res + gate * (proj - x_res)).astype(o_ref.dtype)


def _round_up(n, m):
    return ((n + m - 1) // m) * m


def _vmem_capacity_bytes():
    try:
        return int(pltpu.get_tpu_info().vmem_capacity_bytes)
    except Exception:
        return 64 << 20  # conservative fallback: v7x per-TensorCore VMEM


def _choose_tn(d_in, d_out, max_weight_tile_bytes):
    """Output tile tn (multiple of 128) and the padded output dim it divides.

    The fused weight slab per output tile is (d_in, 2*tn) bf16 = 4*d_in*tn bytes.
    """
    d128 = _round_up(d_out, 128)
    if 4 * d_in * d128 <= max_weight_tile_bytes:
        return d128, d128                       # whole (padded) output dim in one tile
    tn = 128
    while tn * 2 <= d128 and 4 * d_in * (tn * 2) <= max_weight_tile_bytes:
        tn *= 2
    return tn, _round_up(d_out, tn)


def _vmem_estimate(tm, d_in, tn, out_bytes):
    # Double-buffered pipeline blocks.
    est = 2 * (tm * d_in * 2              # bf16 x tile
               + d_in * 2 * tn * 2        # bf16 fused weight slab
               + 2 * tn * 4               # fused f32 bias
               + tm * tn * 4              # f32 residual tile
               + tm * tn * out_bytes)     # output tile
    # In-kernel f32 temporaries: y (tm,2tn), proj/gate (tm,2tn total), mix (tm,tn).
    est += tm * (2 * tn) * 4 * 2 + tm * tn * 4
    est += 4 << 20                        # slack for Mosaic internal scratch
    return est


def highway_forward(x, w_proj, b_proj, w_gate, b_gate, *, tm=None, tn=None):
    """x: (B, D). w_*: (D, D) in PyTorch (out, in) layout. b_*: (D,). Eval-mode forward."""
    B, D = x.shape
    assert w_proj.shape == (D, D) and w_gate.shape == (D, D)
    out_dtype = x.dtype
    out_bytes = jnp.dtype(out_dtype).itemsize

    vmem_cap = _vmem_capacity_bytes()
    vmem_budget = int(vmem_cap * 0.8)            # leave headroom for Mosaic scratch
    max_w_tile = min(16 << 20, vmem_cap // 8)    # ~8 MiB on v7x, 16 MiB on v5e/v6e

    if tn is None:
        tn, d_out = _choose_tn(D, D, max_w_tile)
    else:
        assert tn % 128 == 0
        d_out = _round_up(D, tn)
    n_nt = d_out // tn

    # Batch tile: big enough to raise flops-per-weight-byte (tm=256 for large
    # batches on 256-wide MXUs), but sized to the actual batch to limit padding
    # waste; multiple of 16 for bf16 sublane packing.
    if tm is None:
        tm_max = 256 if B >= 256 else 128
        while True:
            n_bt = -(-B // tm_max)
            tm = _round_up(-(-B // n_bt), 16)
            if _vmem_estimate(tm, D, tn, out_bytes) <= vmem_budget or tm_max <= 128:
                break
            tm_max //= 2
    else:
        assert tm % 16 == 0
        n_bt = -(-B // tm)
    B_pad = tm * n_bt

    # --- operand prep (plain XLA ops, outside the kernel) ---
    x_pad = jnp.pad(x, ((0, B_pad - B), (0, 0))) if B_pad != B else x
    x_bf = x_pad.astype(jnp.bfloat16)                   # streamed GEMM operand (bf16 once)
    x_res = x_pad.astype(jnp.float32)                   # full-precision residual path
    if d_out != D:
        x_res = jnp.pad(x_res, ((0, 0), (0, d_out - D)))

    wp_t = w_proj.T                                     # (in, out)
    wg_t = w_gate.T
    bp, bg = b_proj, b_gate
    if d_out != D:
        wp_t = jnp.pad(wp_t, ((0, 0), (0, d_out - D)))
        wg_t = jnp.pad(wg_t, ((0, 0), (0, d_out - D)))
        bp = jnp.pad(bp, (0, d_out - D))
        bg = jnp.pad(bg, (0, d_out - D))

    # Per output tile j the fused weight slab is [Wp^T[:, j] | Wg^T[:, j]] -> (D, 2*tn) bf16.
    w_cat = jnp.concatenate(
        [wp_t.reshape(D, n_nt, tn), wg_t.reshape(D, n_nt, tn)], axis=-1)
    w_cat = jnp.transpose(w_cat, (1, 0, 2)).astype(jnp.bfloat16)        # (n_nt, D, 2*tn)
    b_cat = jnp.concatenate(
        [bp.reshape(n_nt, 1, tn), bg.reshape(n_nt, 1, tn)], axis=-1
    ).astype(jnp.float32)                                               # (n_nt, 1, 2*tn)

    vmem_limit = int(min(max(_vmem_estimate(tm, D, tn, out_bytes), 32 << 20),
                         vmem_budget))

    # Output-dim axis OUTER, batch axis INNER: weights stay resident across all
    # batch tiles; x / residual / out stream per inner step.
    grid = (n_nt, n_bt)
    # Megacore (v7x): prefer splitting the output-dim axis (halves each core's
    # resident weight footprint); if there is only one weight tile, split batch.
    dims = ("parallel", "arbitrary") if n_nt >= 2 else ("arbitrary", "parallel")

    out = pl.pallas_call(
        highway_kernel,
        out_shape=jax.ShapeDtypeStruct((B_pad, d_out), out_dtype),
        grid_spec=pltpu.PrefetchScalarGridSpec(
            num_scalar_prefetch=0,
            grid=grid,
            in_specs=[
                # bf16 x tile: streams with the inner batch axis.
                pl.BlockSpec((tm, D), lambda j, i: (i, 0)),
                # Fused weight slab: constant over the inner axis -> resident.
                pl.BlockSpec((None, D, 2 * tn), lambda j, i: (j, 0, 0)),
                # Fused bias: resident alongside the weights.
                pl.BlockSpec((None, 1, 2 * tn), lambda j, i: (j, 0, 0)),
                # f32 residual tile for this (i, j) output block.
                pl.BlockSpec((tm, tn), lambda j, i: (i, j)),
            ],
            out_specs=pl.BlockSpec((tm, tn), lambda j, i: (i, j)),
        ),
        compiler_params=pltpu.CompilerParams(
            dimension_semantics=dims,
            vmem_limit_bytes=vmem_limit,
        ),
    )(x_bf, w_cat, b_cat, x_res)
    return out[:B, :D]


def highway_ref(x, w_proj, b_proj, w_gate, b_gate):
    """Pure-JAX f32 reference mirroring the PyTorch module in eval mode."""
    proj = jax.nn.relu(x @ w_proj.T + b_proj)
    gate = jax.nn.sigmoid(x @ w_gate.T + b_gate)
    return gate * proj + (1.0 - gate) * x


def highway_ref_bf16(x, w_proj, b_proj, w_gate, b_gate):
    """Reference matching the kernel's numerics: bf16 GEMM operands, f32 acc, f32 residual."""
    xb = x.astype(jnp.bfloat16)
    yp = jnp.dot(xb, w_proj.T.astype(jnp.bfloat16),
                 preferred_element_type=jnp.float32) + b_proj
    yg = jnp.dot(xb, w_gate.T.astype(jnp.bfloat16),
                 preferred_element_type=jnp.float32) + b_gate
    proj = jnp.maximum(yp, 0.0)
    gate = jax.nn.sigmoid(yg)
    return x + gate * (proj - x)


if __name__ == "__main__":
    # Small shapes; B deliberately not a multiple of the batch tile so the
    # pad-and-slice path runs and the inner (batch) grid axis has 2 steps.
    B, D = 200, 128

    key = jax.random.PRNGKey(0)
    kx, kwp, kbp, kwg, kbg = jax.random.split(key, 5)

    # Deterministic init matching PyTorch nn.Linear default: U(-1/sqrt(in), 1/sqrt(in))
    bound = 1.0 / (D ** 0.5)
    x = jax.random.normal(kx, (B, D), dtype=jnp.float32)
    w_proj = jax.random.uniform(kwp, (D, D), minval=-bound, maxval=bound, dtype=jnp.float32)
    b_proj = jax.random.uniform(kbp, (D,), minval=-bound, maxval=bound, dtype=jnp.float32)
    w_gate = jax.random.uniform(kwg, (D, D), minval=-bound, maxval=bound, dtype=jnp.float32)
    b_gate = jax.random.uniform(kbg, (D,), minval=-bound, maxval=bound, dtype=jnp.float32)

    out = highway_forward(x, w_proj, b_proj, w_gate, b_gate)
    out = jax.block_until_ready(out)
    assert out.shape == (B, D)

    # Check against a reference with matching bf16-GEMM / f32-residual numerics.
    ref_b = highway_ref_bf16(x, w_proj, b_proj, w_gate, b_gate)
    err_b = float(jnp.max(jnp.abs(out - ref_b)))
    assert err_b < 1e-2, f"mismatch vs bf16 reference: max abs err = {err_b}"

    # Check against the full-f32 PyTorch-style reference (looser: bf16 MXU rounding).
    ref_f = highway_ref(x, w_proj, b_proj, w_gate, b_gate)
    err_f = float(jnp.max(jnp.abs(out - ref_f)))
    assert err_f < 5e-2, f"mismatch vs f32 reference: max abs err = {err_f}"

    print("KERNEL_OK")
</pallas_src>

<mosaic_0001>
module attributes {stable_mosaic.version = 11 : i64} {
  func.func @highway_kernel(%arg0: i32, %arg1: i32, %arg2: memref<112x128xbf16, #tpu.memory_space<vmem>>, %arg3: memref<1x128x256xbf16, #tpu.memory_space<vmem>>, %arg4: memref<1x1x256xf32, #tpu.memory_space<vmem>>, %arg5: memref<112x128xf32, #tpu.memory_space<vmem>>, %arg6: memref<112x128xf32, #tpu.memory_space<vmem>>) attributes {dimension_semantics = [#tpu.dimension_semantics<arbitrary>, #tpu.dimension_semantics<parallel>], iteration_bounds = array<i64: 1, 2>, scalar_prefetch = 0 : i64, scratch_operands = 0 : i64, tpu.core_type = #tpu.core_type<tc>, window_params = [{transform_indices = @transform_0, window_bounds = array<i64: 112, 128>}, {transform_indices = @transform_1, window_bounds = array<i64: 1, 128, 256>}, {transform_indices = @transform_2, window_bounds = array<i64: 1, 1, 256>}, {transform_indices = @transform_3, window_bounds = array<i64: 112, 128>}, {transform_indices = @transform_4, window_bounds = array<i64: 112, 128>}]} {
    %c0 = arith.constant 0 : index
    %c0_0 = arith.constant 0 : index
    %0 = vector.load %arg2[%c0, %c0_0] : memref<112x128xbf16, #tpu.memory_space<vmem>>, vector<112x128xbf16>
    %c0_1 = arith.constant 0 : index
    %c0_2 = arith.constant 0 : index
    %c0_3 = arith.constant 0 : index
    %1 = vector.load %arg3[%c0_1, %c0_2, %c0_3] : memref<1x128x256xbf16, #tpu.memory_space<vmem>>, vector<1x128x256xbf16>
    %2 = vector.shape_cast %1 : vector<1x128x256xbf16> to vector<128x256xbf16>
    %cst = arith.constant dense<0.000000e+00> : vector<112x256xf32>
    %3 = tpu.matmul %0, %2, %cst {dimension_numbers = #tpu.dot_dimension_numbers<[1], [0], [0], [1], [0, 0, 1, 1], [], []>} : vector<112x128xbf16>, vector<128x256xbf16>, vector<112x256xf32> -> vector<112x256xf32>
    %c0_4 = arith.constant 0 : index
    %c0_5 = arith.constant 0 : index
    %c0_6 = arith.constant 0 : index
    %4 = vector.load %arg4[%c0_4, %c0_5, %c0_6] : memref<1x1x256xf32, #tpu.memory_space<vmem>>, vector<1x1x256xf32>
    %5 = vector.shape_cast %4 : vector<1x1x256xf32> to vector<1x256xf32>
    %6 = vector.broadcast %5 : vector<1x256xf32> to vector<112x256xf32>
    %7 = arith.addf %3, %6 : vector<112x256xf32>
    %8 = vector.extract_strided_slice %7 {offsets = [0, 0], sizes = [112, 128], strides = [1, 1]} : vector<112x256xf32> to vector<112x128xf32>
    %cst_7 = arith.constant 0.000000e+00 : f32
    %9 = vector.broadcast %cst_7 : f32 to vector<112x128xf32>
    %10 = arith.maximumf %8, %9 : vector<112x128xf32>
    %11 = vector.extract_strided_slice %7 {offsets = [0, 128], sizes = [112, 128], strides = [1, 1]} : vector<112x256xf32> to vector<112x128xf32>
    %12 = arith.negf %11 : vector<112x128xf32>
    %13 = math.exp %12 : vector<112x128xf32>
    %cst_8 = arith.constant 1.000000e+00 : f32
    %14 = vector.broadcast %cst_8 : f32 to vector<112x128xf32>
    %15 = arith.addf %14, %13 : vector<112x128xf32>
    %16 = arith.divf %14, %15 : vector<112x128xf32>
    %c0_9 = arith.constant 0 : index
    %c0_10 = arith.constant 0 : index
    %17 = vector.load %arg5[%c0_9, %c0_10] : memref<112x128xf32, #tpu.memory_space<vmem>>, vector<112x128xf32>
    %18 = arith.subf %10, %17 : vector<112x128xf32>
    %19 = arith.mulf %16, %18 : vector<112x128xf32>
    %20 = arith.addf %17, %19 : vector<112x128xf32>
    %c0_11 = arith.constant 0 : index
    %c0_12 = arith.constant 0 : index
    %21 = vector.load %arg6[%c0_11, %c0_12] : memref<112x128xf32, #tpu.memory_space<vmem>>, vector<112x128xf32>
    tpu.vector_store %arg6[%c0_11, %c0_12], %20 {strides = array<i32>} : memref<112x128xf32, #tpu.memory_space<vmem>>, vector<112x128xf32>,
    return
  }
  func.func @transform_0(%arg0: i32, %arg1: i32) -> (i32, i32) {
    %c0_i32 = arith.constant 0 : i32
    %c0_i32_0 = arith.constant 0 : i32
    return %arg1, %c0_i32 : i32, i32
  }
  func.func @transform_1(%arg0: i32, %arg1: i32) -> (i32, i32, i32) {
    %c0_i32 = arith.constant 0 : i32
    %c0_i32_0 = arith.constant 0 : i32
    %c0_i32_1 = arith.constant 0 : i32
    return %arg0, %c0_i32, %c0_i32_0 : i32, i32, i32
  }
  func.func @transform_2(%arg0: i32, %arg1: i32) -> (i32, i32, i32) {
    %c0_i32 = arith.constant 0 : i32
    %c0_i32_0 = arith.constant 0 : i32
    %c0_i32_1 = arith.constant 0 : i32
    return %arg0, %c0_i32, %c0_i32_0 : i32, i32, i32
  }
  func.func @transform_3(%arg0: i32, %arg1: i32) -> (i32, i32) {
    %c0_i32 = arith.constant 0 : i32
    return %arg1, %arg0 : i32, i32
  }
  func.func @transform_4(%arg0: i32, %arg1: i32) -> (i32, i32) {
    %c0_i32 = arith.constant 0 : i32
    return %arg1, %arg0 : i32, i32
  }
}

</mosaic_0001>

<llo_original>
// kernel: tpu_custom_call.1
$region0: #{tpu_custom_call.1}
  #allocation0 [shape = 'u32[]', space=smem, size = 0x4, offset = 0x4, fixed_abs, tag = 'smem constant byte address 0x4 - core index']
  #allocation1 [shape = 'u32[144,128]{1,0:T(1,128)}', space=vmem, size = 0x12000, scoped, tag = 'internal scratch']
  %s0 = inlined_call_operand.hbm [shape: bf16[224,128], index: 0, kind: input, shape index: {}]
  %s1 = inlined_call_operand.hbm [shape: bf16[1,128,256], index: 1, kind: input, shape index: {}]
  %s2 = inlined_call_operand.vmem [shape: f32[1,1,256], index: 2, kind: input, shape index: {}]
  %s3 = inlined_call_operand.hbm [shape: f32[224,128], index: 3, kind: input, shape index: {}]
  %s4 = inlined_call_operand.hbm [shape: f32[224,128], index: 4, kind: output, shape index: {}]
  %s5 = sld [smem:[#allocation0]]
  $region61: #{tpu_custom_call.1} parent=0
    _
  %s7 = ssub.s32 1, %s5
  %s8 = scalar_select 0, %s7, %s5
  $region1: #{tpu_custom_call.1} parent=0
    #allocation2 [shape = 'u8[57344]{0}', space=vmem, size = 0xe000, scoped, tag = 'input window, operand 0']
    #allocation3 [shape = 's32[2]{0}', space=sflag, size = 0x8, scoped, tag = 'scoped memory for tpu_custom_call.1']
    #allocation4 [shape = 's32[2]{0}', space=sflag, size = 0x8, scoped, tag = 'scoped memory for tpu_custom_call.1']
    #allocation5 [shape = 'u8[65536]{0}', space=vmem, size = 0x10000, scoped, tag = 'input window, operand 1, single buffered']
    #allocation6 [shape = 's32[1]{0}', space=sflag, size = 0x4, scoped, tag = 'scoped memory for tpu_custom_call.1']
    #allocation7 [shape = 'u8[114688]{0}', space=vmem, size = 0x1c000, scoped, tag = 'input window, operand 3']
    #allocation8 [shape = 'u8[114688]{0}', space=vmem, size = 0x1c000, scoped, tag = 'output window, operand 0']
    %9 = vsyncpa [#allocation3], 0
    %s10 = scalar_lea.sflag [#allocation3], 1
    %11 = vsyncpa %s10, 0
    %12 = vsyncpa [#allocation6], 0
    %13 = vsyncpa [#allocation4], 0
    %s14 = scalar_lea.sflag [#allocation4], 1
    %15 = vsyncpa %s14, 0
    loop: start=0, step=1, limit=4
    $region2: #{tpu_custom_call.1} parent=1 // loop_pre_header
      _
    $region3: #{tpu_custom_call.1} parent=1 // loop_header
      %s17 = sphi 0, %s21
      %p18 = scmp.ge.s32.totalorder %s17, 4
      %s24 = sphi 0, %s36
      %s25 = sphi 0, %s32
      %s26 = sphi 0, %s24
      %s27 = sphi 0, %s25
      %s28 = sphi 0, %s26
      %s29 = sphi 0, %s27
      %s39 = sphi 0, %s41
      %s42 = sphi 0, %s39
      %s43 = sphi 0, %s42
      %s59 = sphi 0, %s43
      %s65 = sphi 0, %s67
      %s68 = sphi 0, %s65
      %s69 = sphi 0, %s68
      %s85 = sphi 0, %s69
      %s91 = sphi 0, %s93
      %s94 = sphi 0, %s91
      %s95 = sphi 0, %s94
      %s111 = sphi 0, %s95
      %s119 = sphi 0, %s121
      %s122 = sphi 0, %s119
      %s123 = sphi 0, %s122
      %s139 = sphi 0, %s123
      %s147 = sphi 0, %s149
      %s150 = sphi 0, %s147
      %s151 = sphi 0, %s150
      %s167 = sphi 0, %s151
    $region4: #{tpu_custom_call.1} parent=1 // loop_header_branch
      %20 = sbr.rel (%p18) target = $region8
    $region5: #{tpu_custom_call.1} parent=1 // loop_body
      %s22 = ssub.s32 %s17, 1
      %s23 = ssub.s32 %s17, 2
      %s30 = sadd.s32 1, %s25
      %p31 = scmp.ge.s32.totalorder %s30, 2
      %s32 = scalar_select %p31, 0, %s30
      %s33 = sadd.s32 1, %s24
      %s34 = scalar_select %p31, %s33, %s24
      %p35 = scmp.ge.s32.totalorder %s34, 1
      %s36 = scalar_select %p35, 0, %s34
      %s37 = ssub.s32 %s25, %s32
      %p38 = scmp.eq.s32.totalorder %s37, 0
      %s40 = sadd.s32 %s39, 1
      %s41 = scalar_select %p38, %s39, %s40
      %p44 = pneg %p38
      %p45 = scmp.eq.s32.totalorder %s17, 1
      %p46 = por %p44, %p45
      %p47 = scmp.ne.s32.totalorder %s39, %s42
      %p48 = scmp.eq.s32.totalorder %s17, 0
      %p49 = por %p47, %p48
      %p50 = scmp.ne.s32.totalorder %s39, %s42
      %p51 = scmp.eq.s32.totalorder %s22, 1
      %p52 = por %p50, %p51
      %p53 = scmp.ne.s32.totalorder %s42, %s43
      %p54 = scmp.eq.s32.totalorder %s22, 0
      %p55 = por %p53, %p54
      %p56 = scmp.ne.s32.totalorder %s42, %s43
      %p57 = scmp.eq.s32.totalorder %s23, 1
      %p58 = por %p56, %p57
      %p60 = scmp.ne.s32.totalorder %s43, %s59
      %p61 = scmp.eq.s32.totalorder %s23, 0
      %p62 = por %p60, %p61
      %s63 = ssub.s32 %s24, %s36
      %p64 = scmp.eq.s32.totalorder %s63, 0
      %s66 = sadd.s32 %s65, 1
      %s67 = scalar_select %p64, %s65, %s66
      %p70 = pneg %p64
      %p71 = scmp.eq.s32.totalorder %s17, 1
      %p72 = por %p70, %p71
      %p73 = scmp.ne.s32.totalorder %s65, %s68
      %p74 = scmp.eq.s32.totalorder %s17, 0
      %p75 = por %p73, %p74
      %p76 = scmp.ne.s32.totalorder %s65, %s68
      %p77 = scmp.eq.s32.totalorder %s22, 1
      %p78 = por %p76, %p77
      %p79 = scmp.ne.s32.totalorder %s68, %s69
      %p80 = scmp.eq.s32.totalorder %s22, 0
      %p81 = por %p79, %p80
      %p82 = scmp.ne.s32.totalorder %s68, %s69
      %p83 = scmp.eq.s32.totalorder %s23, 1
      %p84 = por %p82, %p83
      %p86 = scmp.ne.s32.totalorder %s69, %s85
      %p87 = scmp.eq.s32.totalorder %s23, 0
      %p88 = por %p86, %p87
      %s89 = ssub.s32 %s24, %s36
      %p90 = scmp.eq.s32.totalorder %s89, 0
      %s92 = sadd.s32 %s91, 1
      %s93 = scalar_select %p90, %s91, %s92
      %p96 = pneg %p90
      %p97 = scmp.eq.s32.totalorder %s17, 1
      %p98 = por %p96, %p97
      %p99 = scmp.ne.s32.totalorder %s91, %s94
      %p100 = scmp.eq.s32.totalorder %s17, 0
      %p101 = por %p99, %p100
      %p102 = scmp.ne.s32.totalorder %s91, %s94
      %p103 = scmp.eq.s32.totalorder %s22, 1
      %p104 = por %p102, %p103
      %p105 = scmp.ne.s32.totalorder %s94, %s95
      %p106 = scmp.eq.s32.totalorder %s22, 0
      %p107 = por %p105, %p106
      %p108 = scmp.ne.s32.totalorder %s94, %s95
      %p109 = scmp.eq.s32.totalorder %s23, 1
      %p110 = por %p108, %p109
      %p112 = scmp.ne.s32.totalorder %s95, %s111
      %p113 = scmp.eq.s32.totalorder %s23, 0
      %p114 = por %p112, %p113
      %s115 = ssub.s32 %s25, %s32
      %s116 = ssub.s32 %s24, %s36
      %s117 = sor.u32 %s115, %s116
      %p118 = scmp.eq.s32.totalorder %s117, 0
      %s120 = sadd.s32 %s119, 1
      %s121 = scalar_select %p118, %s119, %s120
      %p124 = pneg %p118
      %p125 = scmp.eq.s32.totalorder %s17, 1
      %p126 = por %p124, %p125
      %p127 = scmp.ne.s32.totalorder %s119, %s122
      %p128 = scmp.eq.s32.totalorder %s17, 0
      %p129 = por %p127, %p128
      %p130 = scmp.ne.s32.totalorder %s119, %s122
      %p131 = scmp.eq.s32.totalorder %s22, 1
      %p132 = por %p130, %p131
      %p133 = scmp.ne.s32.totalorder %s122, %s123
      %p134 = scmp.eq.s32.totalorder %s22, 0
      %p135 = por %p133, %p134
      %p136 = scmp.ne.s32.totalorder %s122, %s123
      %p137 = scmp.eq.s32.totalorder %s23, 1
      %p138 = por %p136, %p137
      %p140 = scmp.ne.s32.totalorder %s123, %s139
      %p141 = scmp.eq.s32.totalorder %s23, 0
      %p142 = por %p140, %p141
      %s143 = ssub.s32 %s25, %s32
      %s144 = ssub.s32 %s24, %s36
      %s145 = sor.u32 %s143, %s144
      %p146 = scmp.eq.s32.totalorder %s145, 0
      %s148 = sadd.s32 %s147, 1
      %s149 = scalar_select %p146, %s147, %s148
      %p152 = pneg %p146
      %p153 = scmp.eq.s32.totalorder %s17, 1
      %p154 = por %p152, %p153
      %p155 = scmp.ne.s32.totalorder %s147, %s150
      %p156 = scmp.eq.s32.totalorder %s17, 0
      %p157 = por %p155, %p156
      %p158 = scmp.ne.s32.totalorder %s147, %s150
      %p159 = scmp.eq.s32.totalorder %s22, 1
      %p160 = por %p158, %p159
      %p161 = scmp.ne.s32.totalorder %s150, %s151
      %p162 = scmp.eq.s32.totalorder %s22, 0
      %p163 = por %p161, %p162
      %p164 = scmp.ne.s32.totalorder %s150, %s151
      %p165 = scmp.eq.s32.totalorder %s23, 1
      %p166 = por %p164, %p165
      %p168 = scmp.ne.s32.totalorder %s151, %s167
      %p169 = scmp.eq.s32.totalorder %s23, 0
      %p170 = por %p168, %p169
      %p171 = scmp.le.s32.totalorder 1, %s17
      %p172 = scmp.lt.s32.totalorder %s17, 3
      %p173 = pnand %p171, %p172
      %p174 = pneg %p173
      // Predicated region
      $region9: #{tpu_custom_call.1} parent=5 // pred_check
        _
      $region10: #{tpu_custom_call.1} parent=5 // pred_check_branch
        %176 = sbr.rel (%p173) target = $region12
      $region11: #{tpu_custom_call.1} parent=5 // pred_region
        %s177 = ssub.s32 %s17, 1
        // Predicated region
        $region13: #{tpu_custom_call.1} parent=11 // pred_check
          %p178 = pneg %p81
        $region14: #{tpu_custom_call.1} parent=11 // pred_check_branch
          %180 = sbr.rel (%p178) target = $region16
        $region15: #{tpu_custom_call.1} parent=11 // pred_region
          %s182 = ssub.s32 2048, 2048
          %183 = vsyncadd [#allocation6], %s182
          %s184 = smul.addr %s26, 32
          %s185 = smul.addr %s184, 64
          %s186 = scalar_lea.hbm %s1, %s185
          %s187 = sshll.u32 [#allocation5], 4
          %s188 = int_to_ptr.vmem [resolvable:$true] %s187
          %193 = dma.hbm_to_vmem [thread:$0]  %s186, 2048, %s188, [#allocation6], 128, 128, 8
        $region16: #{tpu_custom_call.1} parent=11 // pred_fallthru
          _
        // Predicated region
        $region17: #{tpu_custom_call.1} parent=11 // pred_check
          %p194 = pneg %p107
        $region18: #{tpu_custom_call.1} parent=11 // pred_check_branch
          %196 = sbr.rel (%p194) target = $region20
        $region19: #{tpu_custom_call.1} parent=11 // pred_region
          %p197 = scmp.lt.s32.totalorder %s26, 0
          %s198 = scalar_select %p197, %s26, 0
          %s199 = smul.addr %s198, 2
          %s200 = scalar_lea.vmem %s2, %s199
        $region20: #{tpu_custom_call.1} parent=11 // pred_fallthru
          _
      $region12: #{tpu_custom_call.1} parent=5 // pred_fallthru
        _
      %p201 = scmp.lt.s32.totalorder %s17, 2
      // Predicated region
      $region21: #{tpu_custom_call.1} parent=5 // pred_check
        %p202 = pneg %p201
      $region22: #{tpu_custom_call.1} parent=5 // pred_check_branch
        %204 = sbr.rel (%p202) target = $region24
      $region23: #{tpu_custom_call.1} parent=5 // pred_region
        // Predicated region
        $region25: #{tpu_custom_call.1} parent=23 // pred_check
          %p205 = pneg %p49
        $region26: #{tpu_custom_call.1} parent=23 // pred_check_branch
          %207 = sbr.rel (%p205) target = $region28
        $region27: #{tpu_custom_call.1} parent=23 // pred_region
          %s208 = sand.u32 %s17, 1
          %s209 = scalar_lea.sflag [#allocation3], %s208
          %s210 = sand.u32 %s39, 1
          %s211 = smul.addr %s210, 56
          %s212 = scalar_lea.vmem [#allocation2], %s211
          %s213 = smul.u32 14, %s25
          %s215 = ssub.s32 896, 896
          %216 = vsyncadd %s209, %s215
          %s217 = smul.addr %s213, 64
          %s218 = scalar_lea.hbm %s0, %s217
          %s219 = sshll.u32 %s212, 4
          %s220 = int_to_ptr.vmem [resolvable:$true] %s219
          %225 = dma.hbm_to_vmem [thread:$0]  %s218, 896, %s220, %s209, 64, 64, 4
        $region28: #{tpu_custom_call.1} parent=23 // pred_fallthru
          _
        // Predicated region
        $region29: #{tpu_custom_call.1} parent=23 // pred_check
          %p226 = pneg %p129
        $region30: #{tpu_custom_call.1} parent=23 // pred_check_branch
          %228 = sbr.rel (%p226) target = $region32
        $region31: #{tpu_custom_call.1} parent=23 // pred_region
          %s229 = sand.u32 %s17, 1
          %s230 = scalar_lea.sflag [#allocation3], %s229
          %s231 = sand.u32 %s119, 1
          %s232 = smul.addr %s231, 112
          %s233 = scalar_lea.vmem [#allocation7], %s232
          %s234 = smul.u32 14, %s25
          %s236 = ssub.s32 1792, 1792
          %237 = vsyncadd %s230, %s236
          %s238 = sadd.s32 %s24, %s234
          %s239 = smul.addr %s238, 128
          %s240 = scalar_lea.hbm %s3, %s239
          %s241 = sshll.u32 %s233, 4
          %s242 = int_to_ptr.vmem [resolvable:$true] %s241
          %247 = dma.hbm_to_vmem [thread:$0]  %s240, 1792, %s242, %s230, 128, 128, 8
        $region32: #{tpu_custom_call.1} parent=23 // pred_fallthru
          _
      $region24: #{tpu_custom_call.1} parent=5 // pred_fallthru
        _
      %p248 = scmp.le.s32.totalorder 1, %s17
      %p249 = scmp.lt.s32.totalorder %s17, 3
      %p250 = pnand %p248, %p249
      %p251 = pneg %p250
      // Predicated region
      $region33: #{tpu_custom_call.1} parent=5 // pred_check
        _
      $region34: #{tpu_custom_call.1} parent=5 // pred_check_branch
        %253 = sbr.rel (%p250) target = $region36
      $region35: #{tpu_custom_call.1} parent=5 // pred_region
        %s254 = ssub.s32 %s17, 1
        %s255 = sand.u32 %s22, 1
        %s256 = scalar_lea.sflag [#allocation3], %s255
        %s257 = sand.u32 %s42, 1
        %s258 = smul.addr %s257, 56
        %s259 = scalar_lea.vmem [#allocation2], %s258
        // Predicated region
        $region37: #{tpu_custom_call.1} parent=35 // pred_check
          %p260 = pneg %p55
        $region38: #{tpu_custom_call.1} parent=35 // pred_check_branch
          %262 = sbr.rel (%p260) target = $region40
        $region39: #{tpu_custom_call.1} parent=35 // pred_region
          %263 = dma.done %s256, 896
        $region40: #{tpu_custom_call.1} parent=35 // pred_fallthru
          _
        // Predicated region
        $region41: #{tpu_custom_call.1} parent=35 // pred_check
          %p264 = pneg %p81
        $region42: #{tpu_custom_call.1} parent=35 // pred_check_branch
          %266 = sbr.rel (%p264) target = $region44
        $region43: #{tpu_custom_call.1} parent=35 // pred_region
          %267 = dma.done [#allocation6], 2048
        $region44: #{tpu_custom_call.1} parent=35 // pred_fallthru
          _
        %s268 = sand.u32 %s22, 1
        %s269 = scalar_lea.sflag [#allocation3], %s268
        %s270 = sand.u32 %s122, 1
        %s271 = smul.addr %s270, 112
        %s272 = scalar_lea.vmem [#allocation7], %s271
        // Predicated region
        $region45: #{tpu_custom_call.1} parent=35 // pred_check
          %p273 = pneg %p135
        $region46: #{tpu_custom_call.1} parent=35 // pred_check_branch
          %275 = sbr.rel (%p273) target = $region48
        $region47: #{tpu_custom_call.1} parent=35 // pred_region
          %276 = dma.done %s269, 1792
        $region48: #{tpu_custom_call.1} parent=35 // pred_fallthru
          _
        %s277 = sand.u32 %s22, 1
        %s278 = scalar_lea.sflag [#allocation3], %s277
        %s279 = sand.u32 %s42, 1
        %s280 = smul.addr %s279, 56
        %s281 = scalar_lea.vmem [#allocation2], %s280
        %p282 = pneg %p55
        %p283 = pneg %p52
        %p284 = pneg %p81
        %p285 = pneg %p78
        %p286 = scmp.lt.s32.totalorder %s26, 0
        %s287 = scalar_select %p286, %s26, 0
        %s288 = smul.addr %s287, 2
        %s289 = scalar_lea.vmem %s2, %s288
        %p290 = pneg %p107
        %p291 = pneg %p104
        %s292 = sand.u32 %s22, 1
        %s293 = scalar_lea.sflag [#allocation3], %s292
        %s294 = sand.u32 %s122, 1
        %s295 = smul.addr %s294, 112
        %s296 = scalar_lea.vmem [#allocation7], %s295
        %p297 = pneg %p135
        %p298 = pneg %p132
        %p299 = pneg %p163
        %p300 = pneg %p160
        %s301 = sand.u32 %s150, 1
        %s302 = scalar_lea.sflag [#allocation4], %s301
        %s303 = sand.u32 %s150, 1
        %s304 = smul.addr %s303, 112
        %s305 = scalar_lea.vmem [#allocation8], %s304
        %s306 = smul.u32 14, %s27
        %p307 = scmp.lt.s32.totalorder %s26, 0
        %s308 = scalar_select %p307, %s26, 0
        %s309 = smul.addr %s308, 2
        %s310 = scalar_lea.vmem %s2, %s309
        %s311 = smul.u32 14, %s27
        %s312 = smul.u32 14, %s27
        %v314 = vld [vmem:[%s259] sm:$0xf]
        %v315 = vld [vmem:[%s259 + $0x4] sm:$0xf]
        %v316 = vld [vmem:[%s259 + $0x8] sm:$0xf]
        %v317 = vld [vmem:[%s259 + $0xc] sm:$0xf]
        %v318 = vld [vmem:[%s259 + $0x10] sm:$0xf]
        %v319 = vld [vmem:[%s259 + $0x14] sm:$0xf]
        %v320 = vld [vmem:[%s259 + $0x18] sm:$0xf]
        %v321 = vld [vmem:[%s259 + $0x1c] sm:$0xf]
        %v322 = vld [vmem:[%s259 + $0x20] sm:$0xf]
        %v323 = vld [vmem:[%s259 + $0x24] sm:$0xf]
        %v324 = vld [vmem:[%s259 + $0x28] sm:$0xf]
        %v325 = vld [vmem:[%s259 + $0x2c] sm:$0xf]
        %v326 = vld [vmem:[%s259 + $0x30] sm:$0xf]
        %v327 = vld [vmem:[%s259 + $0x34] sm:$0xf]
        %v328 = vld [vmem:[#allocation5] sm:$0xff]
        %v329 = vld [vmem:[#allocation5 + $0x8] sm:$0xff]
        %v330 = vld [vmem:[#allocation5 + $0x10] sm:$0xff]
        %v331 = vld [vmem:[#allocation5 + $0x18] sm:$0xff]
        %v332 = vld [vmem:[#allocation5 + $0x20] sm:$0xff]
        %v333 = vld [vmem:[#allocation5 + $0x28] sm:$0xff]
        %v334 = vld [vmem:[#allocation5 + $0x30] sm:$0xff]
        %v335 = vld [vmem:[#allocation5 + $0x38] sm:$0xff]
        %v336 = vld [vmem:[#allocation5 + $0x40] sm:$0xff]
        %v337 = vld [vmem:[#allocation5 + $0x48] sm:$0xff]
        %v338 = vld [vmem:[#allocation5 + $0x50] sm:$0xff]
        %v339 = vld [vmem:[#allocation5 + $0x58] sm:$0xff]
        %v340 = vld [vmem:[#allocation5 + $0x60] sm:$0xff]
        %v341 = vld [vmem:[#allocation5 + $0x68] sm:$0xff]
        %v342 = vld [vmem:[#allocation5 + $0x70] sm:$0xff]
        %v343 = vld [vmem:[#allocation5 + $0x78] sm:$0xff]
        %v344 = vld [vmem:[%s310] sm:$0x3]
        %v346 = vlaneseq
        %v347 = vshrl.u32 %v346, 7
        %v348 = vsub.s32 0, %v347
        %v349 = vrot.slane %v344, %v348
        %v350 = vlaneseq
        %v351 = vshrl.u32 %v350, 7
        %v352 = vsub.s32 1, %v351
        %v353 = vrot.slane %v344, %v352
        %v370 = vunpack.c.l.b16 %v314
        %v371 = vunpack.c.l.b16 %v315
        %v372 = vunpack.c.l.b16 %v316
        %v373 = vunpack.c.l.b16 %v317
        %v374 = vunpack.c.l.b16 %v318
        %v375 = vunpack.c.l.b16 %v319
        %v376 = vunpack.c.l.b16 %v320
        %v377 = vunpack.c.l.b16 %v321
        %v378 = vunpack.c.l.b16 %v322
        %v379 = vunpack.c.l.b16 %v323
        %v380 = vunpack.c.l.b16 %v324
        %v381 = vunpack.c.l.b16 %v325
        %v382 = vunpack.c.l.b16 %v326
        %v383 = vunpack.c.l.b16 %v327
        %v384 = vpack.c.b16 %v371, %v370
        %v385 = vpack.c.b16 %v373, %v372
        %v386 = vpack.c.b16 %v375, %v374
        %v387 = vpack.c.b16 %v377, %v376
        %v388 = vpack.c.b16 %v379, %v378
        %v389 = vpack.c.b16 %v381, %v380
        %v390 = vpack.c.b16 %v383, %v382
        %v414 = vunpack.c.l.b16 %v328
        %v415 = vunpack.c.h.b16 %v328
        %v416 = vunpack.c.l.b16 %v329
        %v417 = vunpack.c.h.b16 %v329
        %v418 = vunpack.c.l.b16 %v330
        %v419 = vunpack.c.h.b16 %v330
        %v420 = vunpack.c.l.b16 %v331
        %v421 = vunpack.c.h.b16 %v331
        %v422 = vunpack.c.l.b16 %v332
        %v423 = vunpack.c.h.b16 %v332
        %v424 = vunpack.c.l.b16 %v333
        %v425 = vunpack.c.h.b16 %v333
        %v426 = vunpack.c.l.b16 %v334
        %v427 = vunpack.c.h.b16 %v334
        %v428 = vunpack.c.l.b16 %v335
        %v429 = vunpack.c.h.b16 %v335
        %v430 = vunpack.c.l.b16 %v336
        %v431 = vunpack.c.h.b16 %v336
        %v432 = vunpack.c.l.b16 %v337
        %v433 = vunpack.c.h.b16 %v337
        %v434 = vunpack.c.l.b16 %v338
        %v435 = vunpack.c.h.b16 %v338
        %v436 = vunpack.c.l.b16 %v339
        %v437 = vunpack.c.h.b16 %v339
        %v438 = vunpack.c.l.b16 %v340
        %v439 = vunpack.c.h.b16 %v340
        %v440 = vunpack.c.l.b16 %v341
        %v441 = vunpack.c.h.b16 %v341
        %v442 = vunpack.c.l.b16 %v342
        %v443 = vunpack.c.h.b16 %v342
        %v444 = vunpack.c.l.b16 %v343
        %v445 = vunpack.c.h.b16 %v343
        %v446 = vpack.c.b16 %v416, %v414
        %v447 = vpack.c.b16 %v417, %v415
        %v448 = vpack.c.b16 %v420, %v418
        %v449 = vpack.c.b16 %v421, %v419
        %v450 = vpack.c.b16 %v424, %v422
        %v451 = vpack.c.b16 %v425, %v423
        %v452 = vpack.c.b16 %v428, %v426
        %v453 = vpack.c.b16 %v429, %v427
        %v454 = vpack.c.b16 %v432, %v430
        %v455 = vpack.c.b16 %v433, %v431
        %v456 = vpack.c.b16 %v436, %v434
        %v457 = vpack.c.b16 %v437, %v435
        %v458 = vpack.c.b16 %v440, %v438
        %v459 = vpack.c.b16 %v441, %v439
        %v460 = vpack.c.b16 %v444, %v442
        %v461 = vpack.c.b16 %v445, %v443
        %478 = vmatprep.subr.bf16.mxu0 %v447
        %479 = vmatpush1.bf16.msra.mxu0 %v446
        %480 = vmatprep.subr.bf16.mxu0 %v449
        %481 = vmatpush1.bf16.msra.mxu0 %v448
        %482 = vmatprep.subr.bf16.mxu0 %v451
        %483 = vmatpush1.bf16.msra.mxu0 %v450
        %484 = vmatprep.subr.bf16.mxu0 %v453
        %485 = vmatpush1.bf16.msra.mxu0 %v452
        %486 = vmatprep.subr.bf16.mxu0 %v455
        %487 = vmatpush1.bf16.msra.mxu0 %v454
        %488 = vmatprep.subr.bf16.mxu0 %v457
        %489 = vmatpush1.bf16.msra.mxu0 %v456
        %490 = vmatprep.subr.bf16.mxu0 %v459
        %491 = vmatpush1.bf16.msra.mxu0 %v458
        %492 = vmatprep.subr.bf16.mxu0 %v461
        %493 = vmatpush1.bf16.msra.mxu0 %v460
        %494 = vmatprep.subr.bf16.mxu0 0
        %495 = vmatpush1.bf16.msra.mxu0 0
        %496 = vmatprep.subr.bf16.mxu0 0
        %497 = vmatpush1.bf16.msra.mxu0 0
        %498 = vmatprep.subr.bf16.mxu0 0
        %499 = vmatpush1.bf16.msra.mxu0 0
        %500 = vmatprep.subr.bf16.mxu0 0
        %501 = vmatpush1.bf16.msra.mxu0 0
        %502 = vmatprep.subr.bf16.mxu0 0
        %503 = vmatpush1.bf16.msra.mxu0 0
        %504 = vmatprep.subr.bf16.mxu0 0
        %505 = vmatpush1.bf16.msra.mxu0 0
        %506 = vmatprep.subr.bf16.mxu0 0
        %507 = vmatpush1.bf16.msra.mxu0 0
        %508 = vmatprep.subr.bf16.mxu0 0
        %509 = vmatpush1.bf16.msra.mxu0 0
        %510 = vmatprep.mubr.bf16.mxu0 0
        %511 = vmatmul.mubr.bf16.gmra.mrb[0].mxu0 %v384
        %v512 = vpop.f32.mrb[0].mxu0
        %v513 = vadd.f32 %v349, %v512
        %v514 = vpop.f32.mrb[0].mxu0
        %v515 = vadd.f32 %v353, %v514
        %v516 = vpop.f32.mrb[0].mxu0
        %v517 = vadd.f32 %v349, %v516
        %v518 = vpop.f32.mrb[0].mxu0
        %v519 = vadd.f32 %v353, %v518
        %520 = vmatprep.mubr.bf16.mxu0 0
        %521 = vmatmul.mubr.bf16.gmra.mrb[0].mxu0 %v385
        %v522 = vpop.f32.mrb[0].mxu0
        %v523 = vadd.f32 %v349, %v522
        %v524 = vpop.f32.mrb[0].mxu0
        %v525 = vadd.f32 %v353, %v524
        %v526 = vpop.f32.mrb[0].mxu0
        %v527 = vadd.f32 %v349, %v526
        %v528 = vpop.f32.mrb[0].mxu0
        %v529 = vadd.f32 %v353, %v528
        %530 = vmatprep.mubr.bf16.mxu0 0
        %531 = vmatmul.mubr.bf16.gmra.mrb[0].mxu0 %v386
        %v532 = vpop.f32.mrb[0].mxu0
        %v533 = vadd.f32 %v349, %v532
        %v534 = vpop.f32.mrb[0].mxu0
        %v535 = vadd.f32 %v353, %v534
        %v536 = vpop.f32.mrb[0].mxu0
        %v537 = vadd.f32 %v349, %v536
        %v538 = vpop.f32.mrb[0].mxu0
        %v539 = vadd.f32 %v353, %v538
        %540 = vmatprep.mubr.bf16.mxu0 0
        %541 = vmatmul.mubr.bf16.gmra.mrb[0].mxu0 %v387
        %v542 = vpop.f32.mrb[0].mxu0
        %v543 = vadd.f32 %v349, %v542
        %v544 = vpop.f32.mrb[0].mxu0
        %v545 = vadd.f32 %v353, %v544
        %v546 = vpop.f32.mrb[0].mxu0
        %v547 = vadd.f32 %v349, %v546
        %v548 = vpop.f32.mrb[0].mxu0
        %v549 = vadd.f32 %v353, %v548
        %550 = vmatprep.mubr.bf16.mxu0 0
        %551 = vmatmul.mubr.bf16.gmra.mrb[0].mxu0 %v388
        %v552 = vpop.f32.mrb[0].mxu0
        %v553 = vadd.f32 %v349, %v552
        %v554 = vpop.f32.mrb[0].mxu0
        %v555 = vadd.f32 %v353, %v554
        %v556 = vpop.f32.mrb[0].mxu0
        %v557 = vadd.f32 %v349, %v556
        %v558 = vpop.f32.mrb[0].mxu0
        %v559 = vadd.f32 %v353, %v558
        %560 = vmatprep.mubr.bf16.mxu0 0
        %561 = vmatmul.mubr.bf16.gmra.mrb[0].mxu0 %v389
        %v562 = vpop.f32.mrb[0].mxu0
        %v563 = vadd.f32 %v349, %v562
        %v564 = vpop.f32.mrb[0].mxu0
        %v565 = vadd.f32 %v353, %v564
        %v566 = vpop.f32.mrb[0].mxu0
        %v567 = vadd.f32 %v349, %v566
        %v568 = vpop.f32.mrb[0].mxu0
        %v569 = vadd.f32 %v353, %v568
        %570 = vmatprep.mubr.bf16.mxu0 0
        %571 = vmatmul.mubr.bf16.gmra.mrb[0].mxu0 %v390
        %v572 = vpop.f32.mrb[0].mxu0
        %v573 = vadd.f32 %v349, %v572
        %v574 = vpop.f32.mrb[0].mxu0
        %v575 = vadd.f32 %v353, %v574
        %v576 = vpop.f32.mrb[0].mxu0
        %v577 = vadd.f32 %v349, %v576
        %v578 = vpop.f32.mrb[0].mxu0
        %v579 = vadd.f32 %v353, %v578
        %580 = vdwg.mxu0
        %v581 = vmax.f32 %v513, 0.0
        %v582 = vmax.f32 %v517, 0.0
        %v583 = vmax.f32 %v523, 0.0
        %v584 = vmax.f32 %v527, 0.0
        %v585 = vmax.f32 %v533, 0.0
        %v586 = vmax.f32 %v537, 0.0
        %v587 = vmax.f32 %v543, 0.0
        %v588 = vmax.f32 %v547, 0.0
        %v589 = vmax.f32 %v553, 0.0
        %v590 = vmax.f32 %v557, 0.0
        %v591 = vmax.f32 %v563, 0.0
        %v592 = vmax.f32 %v567, 0.0
        %v593 = vmax.f32 %v573, 0.0
        %v594 = vmax.f32 %v577, 0.0
        %v595 = vxor.u32 %v515, 2147483648
        %v596 = vxor.u32 %v519, 2147483648
        %v597 = vxor.u32 %v525, 2147483648
        %v598 = vxor.u32 %v529, 2147483648
        %v599 = vxor.u32 %v535, 2147483648
        %v600 = vxor.u32 %v539, 2147483648
        %v601 = vxor.u32 %v545, 2147483648
        %v602 = vxor.u32 %v549, 2147483648
        %v603 = vxor.u32 %v555, 2147483648
        %v604 = vxor.u32 %v559, 2147483648
        %v605 = vxor.u32 %v565, 2147483648
        %v606 = vxor.u32 %v569, 2147483648
        %v607 = vxor.u32 %v575, 2147483648
        %v608 = vxor.u32 %v579, 2147483648
        %v609 = vmul.f32 %v595, 1.442695
        %v610 = vpow.pop %v609
        %v611 = vmul.f32 %v596, 1.442695
        %v612 = vpow.pop %v611
        %v613 = vmul.f32 %v597, 1.442695
        %v614 = vpow.pop %v613
        %v615 = vmul.f32 %v598, 1.442695
        %v616 = vpow.pop %v615
        %v617 = vmul.f32 %v599, 1.442695
        %v618 = vpow.pop %v617
        %v619 = vmul.f32 %v600, 1.442695
        %v620 = vpow.pop %v619
        %v621 = vmul.f32 %v601, 1.442695
        %v622 = vpow.pop %v621
        %v623 = vmul.f32 %v602, 1.442695
        %v624 = vpow.pop %v623
        %v625 = vmul.f32 %v603, 1.442695
        %v626 = vpow.pop %v625
        %v627 = vmul.f32 %v604, 1.442695
        %v628 = vpow.pop %v627
        %v629 = vmul.f32 %v605, 1.442695
        %v630 = vpow.pop %v629
        %v631 = vmul.f32 %v606, 1.442695
        %v632 = vpow.pop %v631
        %v633 = vmul.f32 %v607, 1.442695
        %v634 = vpow.pop %v633
        %v635 = vmul.f32 %v608, 1.442695
        %v636 = vpow.pop %v635
        %v637 = vadd.f32 %v610, 1.0
        %v638 = vadd.f32 %v612, 1.0
        %v639 = vadd.f32 %v614, 1.0
        %v640 = vadd.f32 %v616, 1.0
        %v641 = vadd.f32 %v618, 1.0
        %v642 = vadd.f32 %v620, 1.0
        %v643 = vadd.f32 %v622, 1.0
        %v644 = vadd.f32 %v624, 1.0
        %v645 = vadd.f32 %v626, 1.0
        %v646 = vadd.f32 %v628, 1.0
        %v647 = vadd.f32 %v630, 1.0
        %v648 = vadd.f32 %v632, 1.0
        %v649 = vadd.f32 %v634, 1.0
        %v650 = vadd.f32 %v636, 1.0
        %v651 = vrcp.pop %v637
        %v652 = vmul.f32 1.0, %v651
        %v653 = vrcp.pop %v638
        %v654 = vmul.f32 1.0, %v653
        %v655 = vrcp.pop %v639
        %v656 = vmul.f32 1.0, %v655
        %v657 = vrcp.pop %v640
        %v658 = vmul.f32 1.0, %v657
        %v659 = vrcp.pop %v641
        %v660 = vmul.f32 1.0, %v659
        %v661 = vrcp.pop %v642
        %v662 = vmul.f32 1.0, %v661
        %v663 = vrcp.pop %v643
        %v664 = vmul.f32 1.0, %v663
        %v665 = vrcp.pop %v644
        %v666 = vmul.f32 1.0, %v665
        %v667 = vrcp.pop %v645
        %v668 = vmul.f32 1.0, %v667
        %v669 = vrcp.pop %v646
        %v670 = vmul.f32 1.0, %v669
        %v671 = vrcp.pop %v647
        %v672 = vmul.f32 1.0, %v671
        %v673 = vrcp.pop %v648
        %v674 = vmul.f32 1.0, %v673
        %v675 = vrcp.pop %v649
        %v676 = vmul.f32 1.0, %v675
        %v677 = vrcp.pop %v650
        %v678 = vmul.f32 1.0, %v677
        %v679 = vld [vmem:[%s272] sm:$0xff]
        %v680 = vld [vmem:[%s272 + $0x8] sm:$0xff]
        %v681 = vld [vmem:[%s272 + $0x10] sm:$0xff]
        %v682 = vld [vmem:[%s272 + $0x18] sm:$0xff]
        %v683 = vld [vmem:[%s272 + $0x20] sm:$0xff]
        %v684 = vld [vmem:[%s272 + $0x28] sm:$0xff]
        %v685 = vld [vmem:[%s272 + $0x30] sm:$0xff]
        %v686 = vld [vmem:[%s272 + $0x38] sm:$0xff]
        %v687 = vld [vmem:[%s272 + $0x40] sm:$0xff]
        %v688 = vld [vmem:[%s272 + $0x48] sm:$0xff]
        %v689 = vld [vmem:[%s272 + $0x50] sm:$0xff]
        %v690 = vld [vmem:[%s272 + $0x58] sm:$0xff]
        %v691 = vld [vmem:[%s272 + $0x60] sm:$0xff]
        %v692 = vld [vmem:[%s272 + $0x68] sm:$0xff]
        %v693 = vsub.f32 %v581, %v679
        %v694 = vsub.f32 %v582, %v680
        %v695 = vsub.f32 %v583, %v681
        %v696 = vsub.f32 %v584, %v682
        %v697 = vsub.f32 %v585, %v683
        %v698 = vsub.f32 %v586, %v684
        %v699 = vsub.f32 %v587, %v685
        %v700 = vsub.f32 %v588, %v686
        %v701 = vsub.f32 %v589, %v687
        %v702 = vsub.f32 %v590, %v688
        %v703 = vsub.f32 %v591, %v689
        %v704 = vsub.f32 %v592, %v690
        %v705 = vsub.f32 %v593, %v691
        %v706 = vsub.f32 %v594, %v692
        %v707 = vmul.f32 %v652, %v693
        %v708 = vmul.f32 %v654, %v694
        %v709 = vmul.f32 %v656, %v695
        %v710 = vmul.f32 %v658, %v696
        %v711 = vmul.f32 %v660, %v697
        %v712 = vmul.f32 %v662, %v698
        %v713 = vmul.f32 %v664, %v699
        %v714 = vmul.f32 %v666, %v700
        %v715 = vmul.f32 %v668, %v701
        %v716 = vmul.f32 %v670, %v702
        %v717 = vmul.f32 %v672, %v703
        %v718 = vmul.f32 %v674, %v704
        %v719 = vmul.f32 %v676, %v705
        %v720 = vmul.f32 %v678, %v706
        %v721 = vadd.f32 %v679, %v707
        %v722 = vadd.f32 %v680, %v708
        %v723 = vadd.f32 %v681, %v709
        %v724 = vadd.f32 %v682, %v710
        %v725 = vadd.f32 %v683, %v711
        %v726 = vadd.f32 %v684, %v712
        %v727 = vadd.f32 %v685, %v713
        %v728 = vadd.f32 %v686, %v714
        %v729 = vadd.f32 %v687, %v715
        %v730 = vadd.f32 %v688, %v716
        %v731 = vadd.f32 %v689, %v717
        %v732 = vadd.f32 %v690, %v718
        %v733 = vadd.f32 %v691, %v719
        %v734 = vadd.f32 %v692, %v720
        %735 = vst [vmem:[%s305] sm:$0xff] %v721
        %736 = vst [vmem:[%s305 + $0x8] sm:$0xff] %v722
        %737 = vst [vmem:[%s305 + $0x10] sm:$0xff] %v723
        %738 = vst [vmem:[%s305 + $0x18] sm:$0xff] %v724
        %739 = vst [vmem:[%s305 + $0x20] sm:$0xff] %v725
        %740 = vst [vmem:[%s305 + $0x28] sm:$0xff] %v726
        %741 = vst [vmem:[%s305 + $0x30] sm:$0xff] %v727
        %742 = vst [vmem:[%s305 + $0x38] sm:$0xff] %v728
        %743 = vst [vmem:[%s305 + $0x40] sm:$0xff] %v729
        %744 = vst [vmem:[%s305 + $0x48] sm:$0xff] %v730
        %745 = vst [vmem:[%s305 + $0x50] sm:$0xff] %v731
        %746 = vst [vmem:[%s305 + $0x58] sm:$0xff] %v732
        %747 = vst [vmem:[%s305 + $0x60] sm:$0xff] %v733
        %748 = vst [vmem:[%s305 + $0x68] sm:$0xff] %v734
        %s749 = sand.u32 %s150, 1
        %s750 = scalar_lea.sflag [#allocation4], %s749
        %s751 = sand.u32 %s150, 1
        %s752 = smul.addr %s751, 112
        %s753 = scalar_lea.vmem [#allocation8], %s752
        // Predicated region
        $region49: #{tpu_custom_call.1} parent=35 // pred_check
          %p754 = pneg %p160
        $region50: #{tpu_custom_call.1} parent=35 // pred_check_branch
          %756 = sbr.rel (%p754) target = $region52
        $region51: #{tpu_custom_call.1} parent=35 // pred_region
          %s757 = smul.u32 14, %s27
          %s759 = ssub.s32 1792, 1792
          %760 = vsyncadd %s750, %s759
          %s761 = sadd.s32 %s26, %s757
          %s762 = smul.addr %s761, 128
          %s763 = scalar_lea.hbm %s4, %s762
          %s764 = sshll.u32 %s753, 4
          %s765 = int_to_ptr.vmem [resolvable:$true] %s764
          %770 = dma.vmem_to_hbm [thread:$0]  %s765, 1792, %s763, %s750, 128, 128, 8
        $region52: #{tpu_custom_call.1} parent=35 // pred_fallthru
          _
      $region36: #{tpu_custom_call.1} parent=5 // pred_fallthru
        _
      %p771 = scmp.le.s32.totalorder 2, %s17
      // Predicated region
      $region53: #{tpu_custom_call.1} parent=5 // pred_check
        %p772 = pneg %p771
      $region54: #{tpu_custom_call.1} parent=5 // pred_check_branch
        %774 = sbr.rel (%p772) target = $region56
      $region55: #{tpu_custom_call.1} parent=5 // pred_region
        %s775 = ssub.s32 %s17, 2
        // Predicated region
        $region57: #{tpu_custom_call.1} parent=55 // pred_check
          %p776 = pneg %p166
        $region58: #{tpu_custom_call.1} parent=55 // pred_check_branch
          %778 = sbr.rel (%p776) target = $region60
        $region59: #{tpu_custom_call.1} parent=55 // pred_region
          %s779 = sand.u32 %s151, 1
          %s780 = scalar_lea.sflag [#allocation4], %s779
          %s781 = sand.u32 %s151, 1
          %s782 = smul.addr %s781, 112
          %s783 = scalar_lea.vmem [#allocation8], %s782
          %784 = dma.done %s780, 1792
        $region60: #{tpu_custom_call.1} parent=55 // pred_fallthru
          _
      $region56: #{tpu_custom_call.1} parent=5 // pred_fallthru
        _
    $region6: #{tpu_custom_call.1} parent=1 // loop_footer
      %s21 = sadd.s32 1, %s17
    $region7: #{tpu_custom_call.1} parent=1 // loop_footer_branch
      %16 = sbr.rel target = $region3
    $region8: #{tpu_custom_call.1} parent=1 // loop_exit
      _
    %785 = vsyncpa [#allocation3], 1
    %s786 = scalar_lea.sflag [#allocation3], 1
    %787 = vsyncpa %s786, 1
    %788 = vsyncpa [#allocation6], 1
    %789 = vsyncpa [#allocation4], 1
    %s790 = scalar_lea.sflag [#allocation4], 1
    %791 = vsyncpa %s790, 1

</llo_original>
